<compile_context>
chip_gen: v5e
topology: v5e:2x2
jax: 0.10.0
libtpu: 0.0.40
codegen_flags: <defaults>
</compile_context>

<pallas_src>
import jax
import jax.numpy as jnp
from jax.experimental import pallas as pl
from jax.experimental.pallas import tpu as pltpu

LANE = 128
SUBLANE = 8
HIDDEN = 512


def _round_up(n, m):
    return ((n + m - 1) // m) * m


def actor_kernel(x_ref, w1_ref, b1_ref, w2_ref, b2_ref, w3_ref, b3_ref, o_ref):
    # x tile bf16; weights bf16; biases f32; f32 accumulation on the MXU.
    x = x_ref[...]

    # layer1 + ReLU
    h1 = jnp.dot(x, w1_ref[...], preferred_element_type=jnp.float32)
    h1 = jnp.maximum(h1 + b1_ref[...], 0.0).astype(jnp.bfloat16)

    # layer2 + ReLU
    h2 = jnp.dot(h1, w2_ref[...], preferred_element_type=jnp.float32)
    h2 = jnp.maximum(h2 + b2_ref[...], 0.0).astype(jnp.bfloat16)

    # layer18 (no activation), lane-padded output
    out = jnp.dot(h2, w3_ref[...], preferred_element_type=jnp.float32)
    o_ref[...] = (out + b3_ref[...]).astype(o_ref.dtype)


def init_actor_params(key, n_observations, n_actions, hidden=HIDDEN):
    """Deterministic init mimicking PyTorch nn.Linear (uniform +/- 1/sqrt(fan_in))."""
    ks = jax.random.split(key, 6)

    def linear(kw, kb, fan_in, fan_out):
        bound = 1.0 / jnp.sqrt(jnp.float32(fan_in))
        w = jax.random.uniform(kw, (fan_in, fan_out), jnp.float32, -bound, bound)
        b = jax.random.uniform(kb, (1, fan_out), jnp.float32, -bound, bound)
        return w, b

    w1, b1 = linear(ks[0], ks[1], n_observations, hidden)
    w2, b2 = linear(ks[2], ks[3], hidden, hidden)
    w3, b3 = linear(ks[4], ks[5], hidden, n_actions)
    return {"w1": w1, "b1": b1, "w2": w2, "b2": b2, "w3": w3, "b3": b3}


def prepare_actor_params(params):
    """bf16 weight storage + lane-pad the obs (K) and action (N) dims to 128."""
    n_obs, hidden = params["w1"].shape
    n_actions = params["w3"].shape[1]
    n_obs_pad = _round_up(n_obs, LANE)
    n_out_pad = _round_up(n_actions, LANE)

    # Zero-pad K rows of w1 (padded x columns are also zero -> identical result).
    w1p = jnp.zeros((n_obs_pad, hidden), jnp.float32).at[:n_obs, :].set(params["w1"])
    # Zero-pad output columns of w3/b3 (stripped after the kernel).
    w3p = jnp.zeros((hidden, n_out_pad), jnp.float32).at[:, :n_actions].set(params["w3"])
    b3p = jnp.zeros((1, n_out_pad), jnp.float32).at[:, :n_actions].set(params["b3"])

    return {
        "w1": w1p.astype(jnp.bfloat16),          "b1": params["b1"],
        "w2": params["w2"].astype(jnp.bfloat16), "b2": params["b2"],
        "w3": w3p.astype(jnp.bfloat16),          "b3": b3p,
        "n_obs": n_obs,
        "n_actions": n_actions,
    }


def actor_forward(x, p, *, block_batch=512):
    """x: any leading shape, flattened to (-1, n_obs) like the PyTorch .view()."""
    n_obs = p["n_obs"]
    n_obs_pad = p["w1"].shape[0]
    n_out_pad = p["w3"].shape[1]
    n_actions = p["n_actions"]

    x = x.reshape(-1, n_obs)                       # the .view(-1, n_input)
    batch = x.shape[0]

    # Batch tile: multiple of 8 sublanes, capped at block_batch.
    tb = min(_round_up(block_batch, SUBLANE), _round_up(batch, SUBLANE))
    batch_pad = _round_up(batch, tb)

    # Pad batch rows (to tile multiple) and obs columns (to 128 lanes) at once.
    if batch_pad != batch or n_obs_pad != n_obs:
        x = jnp.pad(x, ((0, batch_pad - batch), (0, n_obs_pad - n_obs)))
    x = x.astype(jnp.bfloat16)

    grid = (batch_pad // tb,)

    def resident(shape):
        # Same block every grid step -> DMA'd once, VMEM-resident.
        return pl.BlockSpec(shape, lambda i, _n=len(shape): (0,) * _n)

    out = pl.pallas_call(
        actor_kernel,
        out_shape=jax.ShapeDtypeStruct((batch_pad, n_out_pad), jnp.float32),
        grid=grid,
        in_specs=[
            pl.BlockSpec((tb, n_obs_pad), lambda i: (i, 0)),
            resident(p["w1"].shape), resident(p["b1"].shape),
            resident(p["w2"].shape), resident(p["b2"].shape),
            resident(p["w3"].shape), resident(p["b3"].shape),
        ],
        out_specs=pl.BlockSpec((tb, n_out_pad), lambda i: (i, 0)),
        compiler_params=pltpu.CompilerParams(
            dimension_semantics=("parallel",)),
    )(x, p["w1"], p["b1"], p["w2"], p["b2"], p["w3"], p["b3"])

    return out[:batch, :n_actions]


def actor_reference(x, p):
    """Pure f32 reference (un-padded, un-quantized)."""
    h1 = jnp.maximum(x @ p["w1"] + p["b1"], 0.0)
    h2 = jnp.maximum(h1 @ p["w2"] + p["b2"], 0.0)
    return h2 @ p["w3"] + p["b3"]


if __name__ == "__main__":
    n_observations = 32
    n_actions = 4

    key = jax.random.PRNGKey(0)
    k_params, k_x1, k_x2 = jax.random.split(key, 3)

    raw_params = init_actor_params(k_params, n_observations, n_actions)
    params = prepare_actor_params(raw_params)

    # --- Test 1: small batch, arbitrary leading shape (exercises .view). ---
    batch = 8
    x_raw = jax.random.normal(k_x1, (batch, 1, n_observations), jnp.float32)
    out = jax.block_until_ready(actor_forward(x_raw, params))

    ref = actor_reference(x_raw.reshape(-1, n_observations), raw_params)
    assert out.shape == (batch, n_actions), out.shape
    # bf16 weight/activation storage -> looser tolerance than pure f32.
    assert jnp.allclose(out, ref, atol=5e-2, rtol=5e-2), "mismatch vs reference (test 1)"

    # --- Test 2: batch not a tile multiple, multiple grid steps. ---
    batch2 = 300
    x_raw2 = jax.random.normal(k_x2, (batch2, n_observations), jnp.float32)
    out2 = jax.block_until_ready(actor_forward(x_raw2, params, block_batch=128))

    ref2 = actor_reference(x_raw2, raw_params)
    assert out2.shape == (batch2, n_actions), out2.shape
    assert jnp.allclose(out2, ref2, atol=5e-2, rtol=5e-2), "mismatch vs reference (test 2)"

    print("KERNEL_OK")
</pallas_src>

<mosaic_0001>
module attributes {stable_mosaic.version = 11 : i64} {
  func.func @actor_kernel(%arg0: i32, %arg1: memref<8x128xbf16, #tpu.memory_space<vmem>>, %arg2: memref<128x512xbf16, #tpu.memory_space<vmem>>, %arg3: memref<1x512xf32, #tpu.memory_space<vmem>>, %arg4: memref<512x512xbf16, #tpu.memory_space<vmem>>, %arg5: memref<1x512xf32, #tpu.memory_space<vmem>>, %arg6: memref<512x128xbf16, #tpu.memory_space<vmem>>, %arg7: memref<1x128xf32, #tpu.memory_space<vmem>>, %arg8: memref<8x128xf32, #tpu.memory_space<vmem>>) attributes {dimension_semantics = [#tpu.dimension_semantics<parallel>], iteration_bounds = array<i64: 1>, scalar_prefetch = 0 : i64, scratch_operands = 0 : i64, tpu.core_type = #tpu.core_type<tc>, window_params = [{transform_indices = @transform_0, window_bounds = array<i64: 8, 128>}, {pipeline_mode = #tpu.pipeline_mode<synchronous>, transform_indices = @transform_1, window_bounds = array<i64: 128, 512>}, {pipeline_mode = #tpu.pipeline_mode<synchronous>, transform_indices = @transform_2, window_bounds = array<i64: 1, 512>}, {pipeline_mode = #tpu.pipeline_mode<synchronous>, transform_indices = @transform_3, window_bounds = array<i64: 512, 512>}, {pipeline_mode = #tpu.pipeline_mode<synchronous>, transform_indices = @transform_4, window_bounds = array<i64: 1, 512>}, {pipeline_mode = #tpu.pipeline_mode<synchronous>, transform_indices = @transform_5, window_bounds = array<i64: 512, 128>}, {pipeline_mode = #tpu.pipeline_mode<synchronous>, transform_indices = @transform_6, window_bounds = array<i64: 1, 128>}, {transform_indices = @transform_7, window_bounds = array<i64: 8, 128>}]} {
    %c0 = arith.constant 0 : index
    %c0_0 = arith.constant 0 : index
    %0 = vector.load %arg1[%c0, %c0_0] : memref<8x128xbf16, #tpu.memory_space<vmem>>, vector<8x128xbf16>
    %c0_1 = arith.constant 0 : index
    %c0_2 = arith.constant 0 : index
    %1 = vector.load %arg2[%c0_1, %c0_2] : memref<128x512xbf16, #tpu.memory_space<vmem>>, vector<128x512xbf16>
    %cst = arith.constant dense<0.000000e+00> : vector<8x512xf32>
    %2 = tpu.matmul %0, %1, %cst {dimension_numbers = #tpu.dot_dimension_numbers<[1], [0], [0], [1], [0, 0, 1, 1], [], []>} : vector<8x128xbf16>, vector<128x512xbf16>, vector<8x512xf32> -> vector<8x512xf32>
    %c0_3 = arith.constant 0 : index
    %c0_4 = arith.constant 0 : index
    %3 = vector.load %arg3[%c0_3, %c0_4] : memref<1x512xf32, #tpu.memory_space<vmem>>, vector<1x512xf32>
    %4 = vector.broadcast %3 : vector<1x512xf32> to vector<8x512xf32>
    %5 = arith.addf %2, %4 : vector<8x512xf32>
    %cst_5 = arith.constant 0.000000e+00 : f32
    %6 = vector.broadcast %cst_5 : f32 to vector<8x512xf32>
    %7 = arith.maximumf %5, %6 : vector<8x512xf32>
    %8 = arith.truncf %7 : vector<8x512xf32> to vector<8x512xbf16>
    %c0_6 = arith.constant 0 : index
    %c0_7 = arith.constant 0 : index
    %9 = vector.load %arg4[%c0_6, %c0_7] : memref<512x512xbf16, #tpu.memory_space<vmem>>, vector<512x512xbf16>
    %cst_8 = arith.constant dense<0.000000e+00> : vector<8x512xf32>
    %10 = tpu.matmul %8, %9, %cst_8 {dimension_numbers = #tpu.dot_dimension_numbers<[1], [0], [0], [1], [0, 0, 1, 1], [], []>} : vector<8x512xbf16>, vector<512x512xbf16>, vector<8x512xf32> -> vector<8x512xf32>
    %c0_9 = arith.constant 0 : index
    %c0_10 = arith.constant 0 : index
    %11 = vector.load %arg5[%c0_9, %c0_10] : memref<1x512xf32, #tpu.memory_space<vmem>>, vector<1x512xf32>
    %12 = vector.broadcast %11 : vector<1x512xf32> to vector<8x512xf32>
    %13 = arith.addf %10, %12 : vector<8x512xf32>
    %cst_11 = arith.constant 0.000000e+00 : f32
    %14 = vector.broadcast %cst_11 : f32 to vector<8x512xf32>
    %15 = arith.maximumf %13, %14 : vector<8x512xf32>
    %16 = arith.truncf %15 : vector<8x512xf32> to vector<8x512xbf16>
    %c0_12 = arith.constant 0 : index
    %c0_13 = arith.constant 0 : index
    %17 = vector.load %arg6[%c0_12, %c0_13] : memref<512x128xbf16, #tpu.memory_space<vmem>>, vector<512x128xbf16>
    %cst_14 = arith.constant dense<0.000000e+00> : vector<8x128xf32>
    %18 = tpu.matmul %16, %17, %cst_14 {dimension_numbers = #tpu.dot_dimension_numbers<[1], [0], [0], [1], [0, 0, 1, 1], [], []>} : vector<8x512xbf16>, vector<512x128xbf16>, vector<8x128xf32> -> vector<8x128xf32>
    %c0_15 = arith.constant 0 : index
    %c0_16 = arith.constant 0 : index
    %19 = vector.load %arg7[%c0_15, %c0_16] : memref<1x128xf32, #tpu.memory_space<vmem>>, vector<1x128xf32>
    %20 = vector.broadcast %19 : vector<1x128xf32> to vector<8x128xf32>
    %21 = arith.addf %18, %20 : vector<8x128xf32>
    %c0_17 = arith.constant 0 : index
    %c0_18 = arith.constant 0 : index
    %22 = vector.load %arg8[%c0_17, %c0_18] : memref<8x128xf32, #tpu.memory_space<vmem>>, vector<8x128xf32>
    tpu.vector_store %arg8[%c0_17, %c0_18], %21 {strides = array<i32>} : memref<8x128xf32, #tpu.memory_space<vmem>>, vector<8x128xf32>,
    return
  }
  func.func @transform_0(%arg0: i32) -> (i32, i32) {
    %c0_i32 = arith.constant 0 : i32
    %c0_i32_0 = arith.constant 0 : i32
    return %arg0, %c0_i32 : i32, i32
  }
  func.func @transform_1(%arg0: i32) -> (i32, i32) {
    %c0_i32 = arith.constant 0 : i32
    %c0_i32_0 = arith.constant 0 : i32
    %c0_i32_1 = arith.constant 0 : i32
    return %c0_i32, %c0_i32_0 : i32, i32
  }
  func.func @transform_2(%arg0: i32) -> (i32, i32) {
    %c0_i32 = arith.constant 0 : i32
    %c0_i32_0 = arith.constant 0 : i32
    %c0_i32_1 = arith.constant 0 : i32
    return %c0_i32, %c0_i32_0 : i32, i32
  }
  func.func @transform_3(%arg0: i32) -> (i32, i32) {
    %c0_i32 = arith.constant 0 : i32
    %c0_i32_0 = arith.constant 0 : i32
    %c0_i32_1 = arith.constant 0 : i32
    return %c0_i32, %c0_i32_0 : i32, i32
  }
  func.func @transform_4(%arg0: i32) -> (i32, i32) {
    %c0_i32 = arith.constant 0 : i32
    %c0_i32_0 = arith.constant 0 : i32
    %c0_i32_1 = arith.constant 0 : i32
    return %c0_i32, %c0_i32_0 : i32, i32
  }
  func.func @transform_5(%arg0: i32) -> (i32, i32) {
    %c0_i32 = arith.constant 0 : i32
    %c0_i32_0 = arith.constant 0 : i32
    %c0_i32_1 = arith.constant 0 : i32
    return %c0_i32, %c0_i32_0 : i32, i32
  }
  func.func @transform_6(%arg0: i32) -> (i32, i32) {
    %c0_i32 = arith.constant 0 : i32
    %c0_i32_0 = arith.constant 0 : i32
    %c0_i32_1 = arith.constant 0 : i32
    return %c0_i32, %c0_i32_0 : i32, i32
  }
  func.func @transform_7(%arg0: i32) -> (i32, i32) {
    %c0_i32 = arith.constant 0 : i32
    %c0_i32_0 = arith.constant 0 : i32
    return %arg0, %c0_i32 : i32, i32
  }
}

</mosaic_0001>

<llo_original>
// kernel: tpu_custom_call.1
$region0: #{tpu_custom_call.1}
  #allocation0 [shape = 'u32[]', space=smem, size = 0x4, offset = 0x4, fixed_abs, tag = 'smem constant byte address 0x4 - core index']
  #allocation1 [shape = 'u32[72,128]{1,0:T(1,128)}', space=vmem, size = 0x9000, scoped, tag = 'internal scratch']
  %s0 = inlined_call_operand.hbm [shape: bf16[8,128], index: 0, kind: input, shape index: {}]
  %s1 = inlined_call_operand.hbm [shape: bf16[128,512], index: 1, kind: input, shape index: {}]
  %s2 = inlined_call_operand.hbm [shape: f32[1,512], index: 2, kind: input, shape index: {}]
  %s3 = inlined_call_operand.hbm [shape: bf16[512,512], index: 3, kind: input, shape index: {}]
  %s4 = inlined_call_operand.hbm [shape: f32[1,512], index: 4, kind: input, shape index: {}]
  %s5 = inlined_call_operand.hbm [shape: bf16[512,128], index: 5, kind: input, shape index: {}]
  %s6 = inlined_call_operand.vmem [shape: f32[1,128], index: 6, kind: input, shape index: {}]
  %s7 = inlined_call_operand.hbm [shape: f32[8,128], index: 7, kind: output, shape index: {}]
  %s8 = sld [smem:[#allocation0]]
  $region62: #{tpu_custom_call.1} parent=0
    _
  %s10 = ssub.s32 1, %s8
  %s11 = scalar_select 0, %s10, %s8
  $region1: #{tpu_custom_call.1} parent=0
    #allocation2 [shape = 'u8[2048]{0}', space=vmem, size = 0x800, scoped, tag = 'input window, operand 0, single buffered']
    #allocation3 [shape = 's32[1]{0}', space=sflag, size = 0x4, scoped, tag = 'scoped memory for tpu_custom_call.1']
    #allocation4 [shape = 's32[1]{0}', space=sflag, size = 0x4, scoped, tag = 'scoped memory for tpu_custom_call.1']
    #allocation5 [shape = 'u8[131072]{0}', space=vmem, size = 0x20000, scoped, tag = 'input window, operand 1, single buffered']
    #allocation6 [shape = 's32[1]{0}', space=sflag, size = 0x4, scoped, tag = 'scoped memory for tpu_custom_call.1']
    #allocation7 [shape = 'u8[2048]{0}', space=vmem, size = 0x800, scoped, tag = 'input window, operand 2, single buffered']
    #allocation8 [shape = 'u8[524288]{0}', space=vmem, size = 0x80000, scoped, tag = 'input window, operand 3, single buffered']
    #allocation9 [shape = 's32[1]{0}', space=sflag, size = 0x4, scoped, tag = 'scoped memory for tpu_custom_call.1']
    #allocation10 [shape = 'u8[2048]{0}', space=vmem, size = 0x800, scoped, tag = 'input window, operand 4, single buffered']
    #allocation11 [shape = 'u8[131072]{0}', space=vmem, size = 0x20000, scoped, tag = 'input window, operand 5, single buffered']
    #allocation12 [shape = 's32[1]{0}', space=sflag, size = 0x4, scoped, tag = 'scoped memory for tpu_custom_call.1']
    #allocation13 [shape = 'u8[4096]{0}', space=vmem, size = 0x1000, scoped, tag = 'output window, operand 0, single buffered']
    %12 = vsyncpa [#allocation3], 0
    %13 = vsyncpa [#allocation6], 0
    %14 = vsyncpa [#allocation9], 0
    %15 = vsyncpa [#allocation12], 0
    %16 = vsyncpa [#allocation4], 0
    // Predicated region
    $region2: #{tpu_custom_call.1} parent=1 // pred_check
      _
    $region3: #{tpu_custom_call.1} parent=1 // pred_check_branch
      %18 = sbr.rel (0) target = $region5
    $region4: #{tpu_custom_call.1} parent=1 // pred_region
      %20 = vsyncadd [#allocation3], 0
      %s22 = sshll.u32 %s0, 4
      %s23 = int_to_ptr.hbm [resolvable:$true] %s22
      %s24 = sshll.u32 [#allocation2], 4
      %s25 = int_to_ptr.vmem [resolvable:$true] %s24
      %27 = dma.hbm_to_vmem [thread:$0]  %s23, 64, %s25, [#allocation3]
    $region5: #{tpu_custom_call.1} parent=1 // pred_fallthru
      _
    // Predicated region
    $region6: #{tpu_custom_call.1} parent=1 // pred_check
      _
    $region7: #{tpu_custom_call.1} parent=1 // pred_check_branch
      %29 = sbr.rel (0) target = $region9
    $region8: #{tpu_custom_call.1} parent=1 // pred_region
      %31 = vsyncadd [#allocation6], 0
      %s32 = sshll.u32 %s1, 4
      %s33 = int_to_ptr.hbm [resolvable:$true] %s32
      %s34 = sshll.u32 [#allocation5], 4
      %s35 = int_to_ptr.vmem [resolvable:$true] %s34
      %40 = dma.hbm_to_vmem [thread:$0]  %s33, 4096, %s35, [#allocation6], 256, 256, 16
    $region9: #{tpu_custom_call.1} parent=1 // pred_fallthru
      _
    // Predicated region
    $region10: #{tpu_custom_call.1} parent=1 // pred_check
      _
    $region11: #{tpu_custom_call.1} parent=1 // pred_check_branch
      %42 = sbr.rel (0) target = $region13
    $region12: #{tpu_custom_call.1} parent=1 // pred_region
      %44 = vsyncadd [#allocation6], 0
      %s46 = sshll.u32 %s2, 4
      %s47 = int_to_ptr.hbm [resolvable:$true] %s46
      %s48 = sshll.u32 [#allocation7], 4
      %s49 = int_to_ptr.vmem [resolvable:$true] %s48
      %51 = dma.hbm_to_vmem [thread:$0]  %s47, 64, %s49, [#allocation6]
    $region13: #{tpu_custom_call.1} parent=1 // pred_fallthru
      _
    // Predicated region
    $region14: #{tpu_custom_call.1} parent=1 // pred_check
      _
    $region15: #{tpu_custom_call.1} parent=1 // pred_check_branch
      %53 = sbr.rel (0) target = $region17
    $region16: #{tpu_custom_call.1} parent=1 // pred_region
      %55 = vsyncadd [#allocation9], 0
      %s56 = sshll.u32 %s3, 4
      %s57 = int_to_ptr.hbm [resolvable:$true] %s56
      %s58 = sshll.u32 [#allocation8], 4
      %s59 = int_to_ptr.vmem [resolvable:$true] %s58
      %64 = dma.hbm_to_vmem [thread:$0]  %s57, 16384, %s59, [#allocation9], 256, 256, 16
    $region17: #{tpu_custom_call.1} parent=1 // pred_fallthru
      _
    // Predicated region
    $region18: #{tpu_custom_call.1} parent=1 // pred_check
      _
    $region19: #{tpu_custom_call.1} parent=1 // pred_check_branch
      %66 = sbr.rel (0) target = $region21
    $region20: #{tpu_custom_call.1} parent=1 // pred_region
      %68 = vsyncadd [#allocation9], 0
      %s70 = sshll.u32 %s4, 4
      %s71 = int_to_ptr.hbm [resolvable:$true] %s70
      %s72 = sshll.u32 [#allocation10], 4
      %s73 = int_to_ptr.vmem [resolvable:$true] %s72
      %75 = dma.hbm_to_vmem [thread:$0]  %s71, 64, %s73, [#allocation9]
    $region21: #{tpu_custom_call.1} parent=1 // pred_fallthru
      _
    // Predicated region
    $region22: #{tpu_custom_call.1} parent=1 // pred_check
      _
    $region23: #{tpu_custom_call.1} parent=1 // pred_check_branch
      %77 = sbr.rel (0) target = $region25
    $region24: #{tpu_custom_call.1} parent=1 // pred_region
      %79 = vsyncadd [#allocation12], 0
      %s80 = sshll.u32 %s5, 4
      %s81 = int_to_ptr.hbm [resolvable:$true] %s80
      %s82 = sshll.u32 [#allocation11], 4
      %s83 = int_to_ptr.vmem [resolvable:$true] %s82
      %88 = dma.hbm_to_vmem [thread:$0]  %s81, 4096, %s83, [#allocation12], 64, 64, 4
    $region25: #{tpu_custom_call.1} parent=1 // pred_fallthru
      _
    // Predicated region
    $region26: #{tpu_custom_call.1} parent=1 // pred_check
      _
    $region27: #{tpu_custom_call.1} parent=1 // pred_check_branch
      %90 = sbr.rel (0) target = $region29
    $region28: #{tpu_custom_call.1} parent=1 // pred_region
      _
    $region29: #{tpu_custom_call.1} parent=1 // pred_fallthru
      _
    // Predicated region
    $region30: #{tpu_custom_call.1} parent=1 // pred_check
      _
    $region31: #{tpu_custom_call.1} parent=1 // pred_check_branch
      %92 = sbr.rel (0) target = $region33
    $region32: #{tpu_custom_call.1} parent=1 // pred_region
      %94 = dma.done [#allocation3], 64
    $region33: #{tpu_custom_call.1} parent=1 // pred_fallthru
      _
    // Predicated region
    $region34: #{tpu_custom_call.1} parent=1 // pred_check
      _
    $region35: #{tpu_custom_call.1} parent=1 // pred_check_branch
      %96 = sbr.rel (0) target = $region37
    $region36: #{tpu_custom_call.1} parent=1 // pred_region
      %98 = dma.done [#allocation6], 4096
    $region37: #{tpu_custom_call.1} parent=1 // pred_fallthru
      _
    // Predicated region
    $region38: #{tpu_custom_call.1} parent=1 // pred_check
      _
    $region39: #{tpu_custom_call.1} parent=1 // pred_check_branch
      %100 = sbr.rel (0) target = $region41
    $region40: #{tpu_custom_call.1} parent=1 // pred_region
      %102 = dma.done [#allocation6], 64
    $region41: #{tpu_custom_call.1} parent=1 // pred_fallthru
      _
    // Predicated region
    $region42: #{tpu_custom_call.1} parent=1 // pred_check
      _
    $region43: #{tpu_custom_call.1} parent=1 // pred_check_branch
      %104 = sbr.rel (0) target = $region45
    $region44: #{tpu_custom_call.1} parent=1 // pred_region
      %106 = dma.done [#allocation9], 16384
    $region45: #{tpu_custom_call.1} parent=1 // pred_fallthru
      _
    // Predicated region
    $region46: #{tpu_custom_call.1} parent=1 // pred_check
      _
    $region47: #{tpu_custom_call.1} parent=1 // pred_check_branch
      %108 = sbr.rel (0) target = $region49
    $region48: #{tpu_custom_call.1} parent=1 // pred_region
      %110 = dma.done [#allocation9], 64
    $region49: #{tpu_custom_call.1} parent=1 // pred_fallthru
      _
    // Predicated region
    $region50: #{tpu_custom_call.1} parent=1 // pred_check
      _
    $region51: #{tpu_custom_call.1} parent=1 // pred_check_branch
      %112 = sbr.rel (0) target = $region53
    $region52: #{tpu_custom_call.1} parent=1 // pred_region
      %114 = dma.done [#allocation12], 4096
    $region53: #{tpu_custom_call.1} parent=1 // pred_fallthru
      _
    %v115 = vld [vmem:[#allocation2] sm:$0xf]
    %v116 = vld [vmem:[#allocation5] sm:$0xff]
    %v117 = vld [vmem:[#allocation5 + $0x8] sm:$0xff]
    %v118 = vld [vmem:[#allocation5 + $0x10] sm:$0xff]
    %v119 = vld [vmem:[#allocation5 + $0x18] sm:$0xff]
    %v120 = vld [vmem:[#allocation5 + $0x20] sm:$0xff]
    %v121 = vld [vmem:[#allocation5 + $0x28] sm:$0xff]
    %v122 = vld [vmem:[#allocation5 + $0x30] sm:$0xff]
    %v123 = vld [vmem:[#allocation5 + $0x38] sm:$0xff]
    %v124 = vld [vmem:[#allocation5 + $0x40] sm:$0xff]
    %v125 = vld [vmem:[#allocation5 + $0x48] sm:$0xff]
    %v126 = vld [vmem:[#allocation5 + $0x50] sm:$0xff]
    %v127 = vld [vmem:[#allocation5 + $0x58] sm:$0xff]
    %v128 = vld [vmem:[#allocation5 + $0x60] sm:$0xff]
    %v129 = vld [vmem:[#allocation5 + $0x68] sm:$0xff]
    %v130 = vld [vmem:[#allocation5 + $0x70] sm:$0xff]
    %v131 = vld [vmem:[#allocation5 + $0x78] sm:$0xff]
    %v132 = vld [vmem:[#allocation5 + $0x80] sm:$0xff]
    %v133 = vld [vmem:[#allocation5 + $0x88] sm:$0xff]
    %v134 = vld [vmem:[#allocation5 + $0x90] sm:$0xff]
    %v135 = vld [vmem:[#allocation5 + $0x98] sm:$0xff]
    %v136 = vld [vmem:[#allocation5 + $0xa0] sm:$0xff]
    %v137 = vld [vmem:[#allocation5 + $0xa8] sm:$0xff]
    %v138 = vld [vmem:[#allocation5 + $0xb0] sm:$0xff]
    %v139 = vld [vmem:[#allocation5 + $0xb8] sm:$0xff]
    %v140 = vld [vmem:[#allocation5 + $0xc0] sm:$0xff]
    %v141 = vld [vmem:[#allocation5 + $0xc8] sm:$0xff]
    %v142 = vld [vmem:[#allocation5 + $0xd0] sm:$0xff]
    %v143 = vld [vmem:[#allocation5 + $0xd8] sm:$0xff]
    %v144 = vld [vmem:[#allocation5 + $0xe0] sm:$0xff]
    %v145 = vld [vmem:[#allocation5 + $0xe8] sm:$0xff]
    %v146 = vld [vmem:[#allocation5 + $0xf0] sm:$0xff]
    %v147 = vld [vmem:[#allocation5 + $0xf8] sm:$0xff]
    %v148 = vld [vmem:[#allocation7] sm:$0xf]
    %v150 = vperm.slane %v148, 0
    %v151 = vperm.slane %v148, 1
    %v152 = vperm.slane %v148, 2
    %v153 = vperm.slane %v148, 3
    %v190 = vunpack.c.l.b16 %v116
    %v191 = vunpack.c.h.b16 %v116
    %v192 = vunpack.c.l.b16 %v117
    %v193 = vunpack.c.h.b16 %v117
    %v194 = vunpack.c.l.b16 %v118
    %v195 = vunpack.c.h.b16 %v118
    %v196 = vunpack.c.l.b16 %v119
    %v197 = vunpack.c.h.b16 %v119
    %v198 = vunpack.c.l.b16 %v120
    %v199 = vunpack.c.h.b16 %v120
    %v200 = vunpack.c.l.b16 %v121
    %v201 = vunpack.c.h.b16 %v121
    %v202 = vunpack.c.l.b16 %v122
    %v203 = vunpack.c.h.b16 %v122
    %v204 = vunpack.c.l.b16 %v123
    %v205 = vunpack.c.h.b16 %v123
    %v206 = vunpack.c.l.b16 %v124
    %v207 = vunpack.c.h.b16 %v124
    %v208 = vunpack.c.l.b16 %v125
    %v209 = vunpack.c.h.b16 %v125
    %v210 = vunpack.c.l.b16 %v126
    %v211 = vunpack.c.h.b16 %v126
    %v212 = vunpack.c.l.b16 %v127
    %v213 = vunpack.c.h.b16 %v127
    %v214 = vunpack.c.l.b16 %v128
    %v215 = vunpack.c.h.b16 %v128
    %v216 = vunpack.c.l.b16 %v129
    %v217 = vunpack.c.h.b16 %v129
    %v218 = vunpack.c.l.b16 %v130
    %v219 = vunpack.c.h.b16 %v130
    %v220 = vunpack.c.l.b16 %v131
    %v221 = vunpack.c.h.b16 %v131
    %v222 = vunpack.c.l.b16 %v132
    %v223 = vunpack.c.h.b16 %v132
    %v224 = vunpack.c.l.b16 %v133
    %v225 = vunpack.c.h.b16 %v133
    %v226 = vunpack.c.l.b16 %v134
    %v227 = vunpack.c.h.b16 %v134
    %v228 = vunpack.c.l.b16 %v135
    %v229 = vunpack.c.h.b16 %v135
    %v230 = vunpack.c.l.b16 %v136
    %v231 = vunpack.c.h.b16 %v136
    %v232 = vunpack.c.l.b16 %v137
    %v233 = vunpack.c.h.b16 %v137
    %v234 = vunpack.c.l.b16 %v138
    %v235 = vunpack.c.h.b16 %v138
    %v236 = vunpack.c.l.b16 %v139
    %v237 = vunpack.c.h.b16 %v139
    %v238 = vunpack.c.l.b16 %v140
    %v239 = vunpack.c.h.b16 %v140
    %v240 = vunpack.c.l.b16 %v141
    %v241 = vunpack.c.h.b16 %v141
    %v242 = vunpack.c.l.b16 %v142
    %v243 = vunpack.c.h.b16 %v142
    %v244 = vunpack.c.l.b16 %v143
    %v245 = vunpack.c.h.b16 %v143
    %v246 = vunpack.c.l.b16 %v144
    %v247 = vunpack.c.h.b16 %v144
    %v248 = vunpack.c.l.b16 %v145
    %v249 = vunpack.c.h.b16 %v145
    %v250 = vunpack.c.l.b16 %v146
    %v251 = vunpack.c.h.b16 %v146
    %v252 = vunpack.c.l.b16 %v147
    %v253 = vunpack.c.h.b16 %v147
    %v254 = vpack.c.b16 %v194, %v190
    %v255 = vpack.c.b16 %v195, %v191
    %v256 = vpack.c.b16 %v196, %v192
    %v257 = vpack.c.b16 %v197, %v193
    %v258 = vpack.c.b16 %v202, %v198
    %v259 = vpack.c.b16 %v203, %v199
    %v260 = vpack.c.b16 %v204, %v200
    %v261 = vpack.c.b16 %v205, %v201
    %v262 = vpack.c.b16 %v210, %v206
    %v263 = vpack.c.b16 %v211, %v207
    %v264 = vpack.c.b16 %v212, %v208
    %v265 = vpack.c.b16 %v213, %v209
    %v266 = vpack.c.b16 %v218, %v214
    %v267 = vpack.c.b16 %v219, %v215
    %v268 = vpack.c.b16 %v220, %v216
    %v269 = vpack.c.b16 %v221, %v217
    %v270 = vpack.c.b16 %v226, %v222
    %v271 = vpack.c.b16 %v227, %v223
    %v272 = vpack.c.b16 %v228, %v224
    %v273 = vpack.c.b16 %v229, %v225
    %v274 = vpack.c.b16 %v234, %v230
    %v275 = vpack.c.b16 %v235, %v231
    %v276 = vpack.c.b16 %v236, %v232
    %v277 = vpack.c.b16 %v237, %v233
    %v278 = vpack.c.b16 %v242, %v238
    %v279 = vpack.c.b16 %v243, %v239
    %v280 = vpack.c.b16 %v244, %v240
    %v281 = vpack.c.b16 %v245, %v241
    %v282 = vpack.c.b16 %v250, %v246
    %v283 = vpack.c.b16 %v251, %v247
    %v284 = vpack.c.b16 %v252, %v248
    %v285 = vpack.c.b16 %v253, %v249
    %318 = vmatpush.bf16.msra.mxu0 %v282
    %319 = vmatpush.bf16.msra.mxu0 %v278
    %320 = vmatpush.bf16.msra.mxu0 %v274
    %321 = vmatpush.bf16.msra.mxu0 %v270
    %322 = vmatpush.bf16.msra.mxu0 %v266
    %323 = vmatpush.bf16.msra.mxu0 %v262
    %324 = vmatpush.bf16.msra.mxu0 %v258
    %325 = vmatpush.bf16.msra.mxu0 %v254
    %326 = vmatmul.bf16.gmra.mxu0 %v115
    %v327 = vpop.f32.mrf.mxu0
    %v328 = vadd.f32 %v150, %v327
    %v329 = vpop.f32.mrf.mxu0
    %330 = vdwg.mxu0
    %331 = vmatpush.bf16.msra.mxu0 %v283
    %332 = vmatpush.bf16.msra.mxu0 %v279
    %333 = vmatpush.bf16.msra.mxu0 %v275
    %334 = vmatpush.bf16.msra.mxu0 %v271
    %335 = vmatpush.bf16.msra.mxu0 %v267
    %336 = vmatpush.bf16.msra.mxu0 %v263
    %337 = vmatpush.bf16.msra.mxu0 %v259
    %338 = vmatpush.bf16.msra.mxu0 %v255
    %339 = vmatmul.bf16.gmra.mxu0 %v115
    %v340 = vpop.f32.mrf.mxu0
    %v341 = vadd.f32 %v151, %v340
    %v342 = vpop.f32.mrf.mxu0
    %343 = vdwg.mxu0
    %344 = vmatpush.bf16.msra.mxu0 %v284
    %345 = vmatpush.bf16.msra.mxu0 %v280
    %346 = vmatpush.bf16.msra.mxu0 %v276
    %347 = vmatpush.bf16.msra.mxu0 %v272
    %348 = vmatpush.bf16.msra.mxu0 %v268
    %349 = vmatpush.bf16.msra.mxu0 %v264
    %350 = vmatpush.bf16.msra.mxu0 %v260
    %351 = vmatpush.bf16.msra.mxu0 %v256
    %352 = vmatmul.bf16.gmra.mxu0 %v115
    %v353 = vpop.f32.mrf.mxu0
    %v354 = vadd.f32 %v152, %v353
    %v355 = vpop.f32.mrf.mxu0
    %356 = vdwg.mxu0
    %357 = vmatpush.bf16.msra.mxu0 %v285
    %358 = vmatpush.bf16.msra.mxu0 %v281
    %359 = vmatpush.bf16.msra.mxu0 %v277
    %360 = vmatpush.bf16.msra.mxu0 %v273
    %361 = vmatpush.bf16.msra.mxu0 %v269
    %362 = vmatpush.bf16.msra.mxu0 %v265
    %363 = vmatpush.bf16.msra.mxu0 %v261
    %364 = vmatpush.bf16.msra.mxu0 %v257
    %365 = vmatmul.bf16.gmra.mxu0 %v115
    %v366 = vpop.f32.mrf.mxu0
    %v367 = vadd.f32 %v153, %v366
    %v368 = vpop.f32.mrf.mxu0
    %369 = vdwg.mxu0
    %v370 = vmax.f32 %v328, 0.0
    %v371 = vmax.f32 %v341, 0.0
    %v372 = vmax.f32 %v354, 0.0
    %v373 = vmax.f32 %v367, 0.0
    %v374 = vpack.c.bf16 %v370, %v370
    %v375 = vpack.c.bf16 %v371, %v371
    %v376 = vpack.c.bf16 %v372, %v372
    %v377 = vpack.c.bf16 %v373, %v373
    %v378 = vld [vmem:[#allocation8] sm:$0xff]
    %v379 = vld [vmem:[#allocation8 + $0x8] sm:$0xff]
    %v380 = vld [vmem:[#allocation8 + $0x10] sm:$0xff]
    %v381 = vld [vmem:[#allocation8 + $0x18] sm:$0xff]
    %v382 = vld [vmem:[#allocation8 + $0x20] sm:$0xff]
    %v383 = vld [vmem:[#allocation8 + $0x28] sm:$0xff]
    %v384 = vld [vmem:[#allocation8 + $0x30] sm:$0xff]
    %v385 = vld [vmem:[#allocation8 + $0x38] sm:$0xff]
    %v386 = vld [vmem:[#allocation8 + $0x40] sm:$0xff]
    %v387 = vld [vmem:[#allocation8 + $0x48] sm:$0xff]
    %v388 = vld [vmem:[#allocation8 + $0x50] sm:$0xff]
    %v389 = vld [vmem:[#allocation8 + $0x58] sm:$0xff]
    %v390 = vld [vmem:[#allocation8 + $0x60] sm:$0xff]
    %v391 = vld [vmem:[#allocation8 + $0x68] sm:$0xff]
    %v392 = vld [vmem:[#allocation8 + $0x70] sm:$0xff]
    %v393 = vld [vmem:[#allocation8 + $0x78] sm:$0xff]
    %v394 = vld [vmem:[#allocation8 + $0x80] sm:$0xff]
    %v395 = vld [vmem:[#allocation8 + $0x88] sm:$0xff]
    %v396 = vld [vmem:[#allocation8 + $0x90] sm:$0xff]
    %v397 = vld [vmem:[#allocation8 + $0x98] sm:$0xff]
    %v398 = vld [vmem:[#allocation8 + $0xa0] sm:$0xff]
    %v399 = vld [vmem:[#allocation8 + $0xa8] sm:$0xff]
    %v400 = vld [vmem:[#allocation8 + $0xb0] sm:$0xff]
    %v401 = vld [vmem:[#allocation8 + $0xb8] sm:$0xff]
    %v402 = vld [vmem:[#allocation8 + $0xc0] sm:$0xff]
    %v403 = vld [vmem:[#allocation8 + $0xc8] sm:$0xff]
    %v404 = vld [vmem:[#allocation8 + $0xd0] sm:$0xff]
    %v405 = vld [vmem:[#allocation8 + $0xd8] sm:$0xff]
    %v406 = vld [vmem:[#allocation8 + $0xe0] sm:$0xff]
    %v407 = vld [vmem:[#allocation8 + $0xe8] sm:$0xff]
    %v408 = vld [vmem:[#allocation8 + $0xf0] sm:$0xff]
    %v409 = vld [vmem:[#allocation8 + $0xf8] sm:$0xff]
    %v410 = vld [vmem:[#allocation8 + $0x100] sm:$0xff]
    %v411 = vld [vmem:[#allocation8 + $0x108] sm:$0xff]
    %v412 = vld [vmem:[#allocation8 + $0x110] sm:$0xff]
    %v413 = vld [vmem:[#allocation8 + $0x118] sm:$0xff]
    %v414 = vld [vmem:[#allocation8 + $0x120] sm:$0xff]
    %v415 = vld [vmem:[#allocation8 + $0x128] sm:$0xff]
    %v416 = vld [vmem:[#allocation8 + $0x130] sm:$0xff]
    %v417 = vld [vmem:[#allocation8 + $0x138] sm:$0xff]
    %v418 = vld [vmem:[#allocation8 + $0x140] sm:$0xff]
    %v419 = vld [vmem:[#allocation8 + $0x148] sm:$0xff]
    %v420 = vld [vmem:[#allocation8 + $0x150] sm:$0xff]
    %v421 = vld [vmem:[#allocation8 + $0x158] sm:$0xff]
    %v422 = vld [vmem:[#allocation8 + $0x160] sm:$0xff]
    %v423 = vld [vmem:[#allocation8 + $0x168] sm:$0xff]
    %v424 = vld [vmem:[#allocation8 + $0x170] sm:$0xff]
    %v425 = vld [vmem:[#allocation8 + $0x178] sm:$0xff]
    %v426 = vld [vmem:[#allocation8 + $0x180] sm:$0xff]
    %v427 = vld [vmem:[#allocation8 + $0x188] sm:$0xff]
    %v428 = vld [vmem:[#allocation8 + $0x190] sm:$0xff]
    %v429 = vld [vmem:[#allocation8 + $0x198] sm:$0xff]
    %v430 = vld [vmem:[#allocation8 + $0x1a0] sm:$0xff]
    %v431 = vld [vmem:[#allocation8 + $0x1a8] sm:$0xff]
    %v432 = vld [vmem:[#allocation8 + $0x1b0] sm:$0xff]
    %v433 = vld [vmem:[#allocation8 + $0x1b8] sm:$0xff]
    %v434 = vld [vmem:[#allocation8 + $0x1c0] sm:$0xff]
    %v435 = vld [vmem:[#allocation8 + $0x1c8] sm:$0xff]
    %v436 = vld [vmem:[#allocation8 + $0x1d0] sm:$0xff]
    %v437 = vld [vmem:[#allocation8 + $0x1d8] sm:$0xff]
    %v438 = vld [vmem:[#allocation8 + $0x1e0] sm:$0xff]
    %v439 = vld [vmem:[#allocation8 + $0x1e8] sm:$0xff]
    %v440 = vld [vmem:[#allocation8 + $0x1f0] sm:$0xff]
    %v441 = vld [vmem:[#allocation8 + $0x1f8] sm:$0xff]
    %v442 = vld [vmem:[#allocation8 + $0x200] sm:$0xff]
    %v443 = vld [vmem:[#allocation8 + $0x208] sm:$0xff]
    %v444 = vld [vmem:[#allocation8 + $0x210] sm:$0xff]
    %v445 = vld [vmem:[#allocation8 + $0x218] sm:$0xff]
    %v446 = vld [vmem:[#allocation8 + $0x220] sm:$0xff]
    %v447 = vld [vmem:[#allocation8 + $0x228] sm:$0xff]
    %v448 = vld [vmem:[#allocation8 + $0x230] sm:$0xff]
    %v449 = vld [vmem:[#allocation8 + $0x238] sm:$0xff]
    %v450 = vld [vmem:[#allocation8 + $0x240] sm:$0xff]
    %v451 = vld [vmem:[#allocation8 + $0x248] sm:$0xff]
    %v452 = vld [vmem:[#allocation8 + $0x250] sm:$0xff]
    %v453 = vld [vmem:[#allocation8 + $0x258] sm:$0xff]
    %v454 = vld [vmem:[#allocation8 + $0x260] sm:$0xff]
    %v455 = vld [vmem:[#allocation8 + $0x268] sm:$0xff]
    %v456 = vld [vmem:[#allocation8 + $0x270] sm:$0xff]
    %v457 = vld [vmem:[#allocation8 + $0x278] sm:$0xff]
    %v458 = vld [vmem:[#allocation8 + $0x280] sm:$0xff]
    %v459 = vld [vmem:[#allocation8 + $0x288] sm:$0xff]
    %v460 = vld [vmem:[#allocation8 + $0x290] sm:$0xff]
    %v461 = vld [vmem:[#allocation8 + $0x298] sm:$0xff]
    %v462 = vld [vmem:[#allocation8 + $0x2a0] sm:$0xff]
    %v463 = vld [vmem:[#allocation8 + $0x2a8] sm:$0xff]
    %v464 = vld [vmem:[#allocation8 + $0x2b0] sm:$0xff]
    %v465 = vld [vmem:[#allocation8 + $0x2b8] sm:$0xff]
    %v466 = vld [vmem:[#allocation8 + $0x2c0] sm:$0xff]
    %v467 = vld [vmem:[#allocation8 + $0x2c8] sm:$0xff]
    %v468 = vld [vmem:[#allocation8 + $0x2d0] sm:$0xff]
    %v469 = vld [vmem:[#allocation8 + $0x2d8] sm:$0xff]
    %v470 = vld [vmem:[#allocation8 + $0x2e0] sm:$0xff]
    %v471 = vld [vmem:[#allocation8 + $0x2e8] sm:$0xff]
    %v472 = vld [vmem:[#allocation8 + $0x2f0] sm:$0xff]
    %v473 = vld [vmem:[#allocation8 + $0x2f8] sm:$0xff]
    %v474 = vld [vmem:[#allocation8 + $0x300] sm:$0xff]
    %v475 = vld [vmem:[#allocation8 + $0x308] sm:$0xff]
    %v476 = vld [vmem:[#allocation8 + $0x310] sm:$0xff]
    %v477 = vld [vmem:[#allocation8 + $0x318] sm:$0xff]
    %v478 = vld [vmem:[#allocation8 + $0x320] sm:$0xff]
    %v479 = vld [vmem:[#allocation8 + $0x328] sm:$0xff]
    %v480 = vld [vmem:[#allocation8 + $0x330] sm:$0xff]
    %v481 = vld [vmem:[#allocation8 + $0x338] sm:$0xff]
    %v482 = vld [vmem:[#allocation8 + $0x340] sm:$0xff]
    %v483 = vld [vmem:[#allocation8 + $0x348] sm:$0xff]
    %v484 = vld [vmem:[#allocation8 + $0x350] sm:$0xff]
    %v485 = vld [vmem:[#allocation8 + $0x358] sm:$0xff]
    %v486 = vld [vmem:[#allocation8 + $0x360] sm:$0xff]
    %v487 = vld [vmem:[#allocation8 + $0x368] sm:$0xff]
    %v488 = vld [vmem:[#allocation8 + $0x370] sm:$0xff]
    %v489 = vld [vmem:[#allocation8 + $0x378] sm:$0xff]
    %v490 = vld [vmem:[#allocation8 + $0x380] sm:$0xff]
    %v491 = vld [vmem:[#allocation8 + $0x388] sm:$0xff]
    %v492 = vld [vmem:[#allocation8 + $0x390] sm:$0xff]
    %v493 = vld [vmem:[#allocation8 + $0x398] sm:$0xff]
    %v494 = vld [vmem:[#allocation8 + $0x3a0] sm:$0xff]
    %v495 = vld [vmem:[#allocation8 + $0x3a8] sm:$0xff]
    %v496 = vld [vmem:[#allocation8 + $0x3b0] sm:$0xff]
    %v497 = vld [vmem:[#allocation8 + $0x3b8] sm:$0xff]
    %v498 = vld [vmem:[#allocation8 + $0x3c0] sm:$0xff]
    %v499 = vld [vmem:[#allocation8 + $0x3c8] sm:$0xff]
    %v500 = vld [vmem:[#allocation8 + $0x3d0] sm:$0xff]
    %v501 = vld [vmem:[#allocation8 + $0x3d8] sm:$0xff]
    %v502 = vld [vmem:[#allocation8 + $0x3e0] sm:$0xff]
    %v503 = vld [vmem:[#allocation8 + $0x3e8] sm:$0xff]
    %v504 = vld [vmem:[#allocation8 + $0x3f0] sm:$0xff]
    %v505 = vld [vmem:[#allocation8 + $0x3f8] sm:$0xff]
    %v506 = vld [vmem:[#allocation10] sm:$0xf]
    %v508 = vperm.slane %v506, 0
    %v509 = vperm.slane %v506, 1
    %v510 = vperm.slane %v506, 2
    %v511 = vperm.slane %v506, 3
    %v644 = vunpack.c.l.b16 %v378
    %v645 = vunpack.c.h.b16 %v378
    %v646 = vunpack.c.l.b16 %v379
    %v647 = vunpack.c.h.b16 %v379
    %v648 = vunpack.c.l.b16 %v380
    %v649 = vunpack.c.h.b16 %v380
    %v650 = vunpack.c.l.b16 %v381
    %v651 = vunpack.c.h.b16 %v381
    %v652 = vunpack.c.l.b16 %v382
    %v653 = vunpack.c.h.b16 %v382
    %v654 = vunpack.c.l.b16 %v383
    %v655 = vunpack.c.h.b16 %v383
    %v656 = vunpack.c.l.b16 %v384
    %v657 = vunpack.c.h.b16 %v384
    %v658 = vunpack.c.l.b16 %v385
    %v659 = vunpack.c.h.b16 %v385
    %v660 = vunpack.c.l.b16 %v386
    %v661 = vunpack.c.h.b16 %v386
    %v662 = vunpack.c.l.b16 %v387
    %v663 = vunpack.c.h.b16 %v387
    %v664 = vunpack.c.l.b16 %v388
    %v665 = vunpack.c.h.b16 %v388
    %v666 = vunpack.c.l.b16 %v389
    %v667 = vunpack.c.h.b16 %v389
    %v668 = vunpack.c.l.b16 %v390
    %v669 = vunpack.c.h.b16 %v390
    %v670 = vunpack.c.l.b16 %v391
    %v671 = vunpack.c.h.b16 %v391
    %v672 = vunpack.c.l.b16 %v392
    %v673 = vunpack.c.h.b16 %v392
    %v674 = vunpack.c.l.b16 %v393
    %v675 = vunpack.c.h.b16 %v393
    %v676 = vunpack.c.l.b16 %v394
    %v677 = vunpack.c.h.b16 %v394
    %v678 = vunpack.c.l.b16 %v395
    %v679 = vunpack.c.h.b16 %v395
    %v680 = vunpack.c.l.b16 %v396
    %v681 = vunpack.c.h.b16 %v396
    %v682 = vunpack.c.l.b16 %v397
    %v683 = vunpack.c.h.b16 %v397
    %v684 = vunpack.c.l.b16 %v398
    %v685 = vunpack.c.h.b16 %v398
    %v686 = vunpack.c.l.b16 %v399
    %v687 = vunpack.c.h.b16 %v399
    %v688 = vunpack.c.l.b16 %v400
    %v689 = vunpack.c.h.b16 %v400
    %v690 = vunpack.c.l.b16 %v401
    %v691 = vunpack.c.h.b16 %v401
    %v692 = vunpack.c.l.b16 %v402
    %v693 = vunpack.c.h.b16 %v402
    %v694 = vunpack.c.l.b16 %v403
    %v695 = vunpack.c.h.b16 %v403
    %v696 = vunpack.c.l.b16 %v404
    %v697 = vunpack.c.h.b16 %v404
    %v698 = vunpack.c.l.b16 %v405
    %v699 = vunpack.c.h.b16 %v405
    %v700 = vunpack.c.l.b16 %v406
    %v701 = vunpack.c.h.b16 %v406
    %v702 = vunpack.c.l.b16 %v407
    %v703 = vunpack.c.h.b16 %v407
    %v704 = vunpack.c.l.b16 %v408
    %v705 = vunpack.c.h.b16 %v408
    %v706 = vunpack.c.l.b16 %v409
    %v707 = vunpack.c.h.b16 %v409
    %v708 = vunpack.c.l.b16 %v410
    %v709 = vunpack.c.h.b16 %v410
    %v710 = vunpack.c.l.b16 %v411
    %v711 = vunpack.c.h.b16 %v411
    %v712 = vunpack.c.l.b16 %v412
    %v713 = vunpack.c.h.b16 %v412
    %v714 = vunpack.c.l.b16 %v413
    %v715 = vunpack.c.h.b16 %v413
    %v716 = vunpack.c.l.b16 %v414
    %v717 = vunpack.c.h.b16 %v414
    %v718 = vunpack.c.l.b16 %v415
    %v719 = vunpack.c.h.b16 %v415
    %v720 = vunpack.c.l.b16 %v416
    %v721 = vunpack.c.h.b16 %v416
    %v722 = vunpack.c.l.b16 %v417
    %v723 = vunpack.c.h.b16 %v417
    %v724 = vunpack.c.l.b16 %v418
    %v725 = vunpack.c.h.b16 %v418
    %v726 = vunpack.c.l.b16 %v419
    %v727 = vunpack.c.h.b16 %v419
    %v728 = vunpack.c.l.b16 %v420
    %v729 = vunpack.c.h.b16 %v420
    %v730 = vunpack.c.l.b16 %v421
    %v731 = vunpack.c.h.b16 %v421
    %v732 = vunpack.c.l.b16 %v422
    %v733 = vunpack.c.h.b16 %v422
    %v734 = vunpack.c.l.b16 %v423
    %v735 = vunpack.c.h.b16 %v423
    %v736 = vunpack.c.l.b16 %v424
    %v737 = vunpack.c.h.b16 %v424
    %v738 = vunpack.c.l.b16 %v425
    %v739 = vunpack.c.h.b16 %v425
    %v740 = vunpack.c.l.b16 %v426
    %v741 = vunpack.c.h.b16 %v426
    %v742 = vunpack.c.l.b16 %v427
    %v743 = vunpack.c.h.b16 %v427
    %v744 = vunpack.c.l.b16 %v428
    %v745 = vunpack.c.h.b16 %v428
    %v746 = vunpack.c.l.b16 %v429
    %v747 = vunpack.c.h.b16 %v429
    %v748 = vunpack.c.l.b16 %v430
    %v749 = vunpack.c.h.b16 %v430
    %v750 = vunpack.c.l.b16 %v431
    %v751 = vunpack.c.h.b16 %v431
    %v752 = vunpack.c.l.b16 %v432
    %v753 = vunpack.c.h.b16 %v432
    %v754 = vunpack.c.l.b16 %v433
    %v755 = vunpack.c.h.b16 %v433
    %v756 = vunpack.c.l.b16 %v434
    %v757 = vunpack.c.h.b16 %v434
    %v758 = vunpack.c.l.b16 %v435
    %v759 = vunpack.c.h.b16 %v435
    %v760 = vunpack.c.l.b16 %v436
    %v761 = vunpack.c.h.b16 %v436
    %v762 = vunpack.c.l.b16 %v437
    %v763 = vunpack.c.h.b16 %v437
    %v764 = vunpack.c.l.b16 %v438
    %v765 = vunpack.c.h.b16 %v438
    %v766 = vunpack.c.l.b16 %v439
    %v767 = vunpack.c.h.b16 %v439
    %v768 = vunpack.c.l.b16 %v440
    %v769 = vunpack.c.h.b16 %v440
    %v770 = vunpack.c.l.b16 %v441
    %v771 = vunpack.c.h.b16 %v441
    %v772 = vunpack.c.l.b16 %v442
    %v773 = vunpack.c.h.b16 %v442
    %v774 = vunpack.c.l.b16 %v443
    %v775 = vunpack.c.h.b16 %v443
    %v776 = vunpack.c.l.b16 %v444
    %v777 = vunpack.c.h.b16 %v444
    %v778 = vunpack.c.l.b16 %v445
    %v779 = vunpack.c.h.b16 %v445
    %v780 = vunpack.c.l.b16 %v446
    %v781 = vunpack.c.h.b16 %v446
    %v782 = vunpack.c.l.b16 %v447
    %v783 = vunpack.c.h.b16 %v447
    %v784 = vunpack.c.l.b16 %v448
    %v785 = vunpack.c.h.b16 %v448
    %v786 = vunpack.c.l.b16 %v449
    %v787 = vunpack.c.h.b16 %v449
    %v788 = vunpack.c.l.b16 %v450
    %v789 = vunpack.c.h.b16 %v450
    %v790 = vunpack.c.l.b16 %v451
    %v791 = vunpack.c.h.b16 %v451
    %v792 = vunpack.c.l.b16 %v452
    %v793 = vunpack.c.h.b16 %v452
    %v794 = vunpack.c.l.b16 %v453
    %v795 = vunpack.c.h.b16 %v453
    %v796 = vunpack.c.l.b16 %v454
    %v797 = vunpack.c.h.b16 %v454
    %v798 = vunpack.c.l.b16 %v455
    %v799 = vunpack.c.h.b16 %v455
    %v800 = vunpack.c.l.b16 %v456
    %v801 = vunpack.c.h.b16 %v456
    %v802 = vunpack.c.l.b16 %v457
    %v803 = vunpack.c.h.b16 %v457
    %v804 = vunpack.c.l.b16 %v458
    %v805 = vunpack.c.h.b16 %v458
    %v806 = vunpack.c.l.b16 %v459
    %v807 = vunpack.c.h.b16 %v459
    %v808 = vunpack.c.l.b16 %v460
    %v809 = vunpack.c.h.b16 %v460
    %v810 = vunpack.c.l.b16 %v461
    %v811 = vunpack.c.h.b16 %v461
    %v812 = vunpack.c.l.b16 %v462
    %v813 = vunpack.c.h.b16 %v462
    %v814 = vunpack.c.l.b16 %v463
    %v815 = vunpack.c.h.b16 %v463
    %v816 = vunpack.c.l.b16 %v464
    %v817 = vunpack.c.h.b16 %v464
    %v818 = vunpack.c.l.b16 %v465
    %v819 = vunpack.c.h.b16 %v465
    %v820 = vunpack.c.l.b16 %v466
    %v821 = vunpack.c.h.b16 %v466
    %v822 = vunpack.c.l.b16 %v467
    %v823 = vunpack.c.h.b16 %v467
    %v824 = vunpack.c.l.b16 %v468
    %v825 = vunpack.c.h.b16 %v468
    %v826 = vunpack.c.l.b16 %v469
    %v827 = vunpack.c.h.b16 %v469
    %v828 = vunpack.c.l.b16 %v470
    %v829 = vunpack.c.h.b16 %v470
    %v830 = vunpack.c.l.b16 %v471
    %v831 = vunpack.c.h.b16 %v471
    %v832 = vunpack.c.l.b16 %v472
    %v833 = vunpack.c.h.b16 %v472
    %v834 = vunpack.c.l.b16 %v473
    %v835 = vunpack.c.h.b16 %v473
    %v836 = vunpack.c.l.b16 %v474
    %v837 = vunpack.c.h.b16 %v474
    %v838 = vunpack.c.l.b16 %v475
    %v839 = vunpack.c.h.b16 %v475
    %v840 = vunpack.c.l.b16 %v476
    %v841 = vunpack.c.h.b16 %v476
    %v842 = vunpack.c.l.b16 %v477
    %v843 = vunpack.c.h.b16 %v477
    %v844 = vunpack.c.l.b16 %v478
    %v845 = vunpack.c.h.b16 %v478
    %v846 = vunpack.c.l.b16 %v479
    %v847 = vunpack.c.h.b16 %v479
    %v848 = vunpack.c.l.b16 %v480
    %v849 = vunpack.c.h.b16 %v480
    %v850 = vunpack.c.l.b16 %v481
    %v851 = vunpack.c.h.b16 %v481
    %v852 = vunpack.c.l.b16 %v482
    %v853 = vunpack.c.h.b16 %v482
    %v854 = vunpack.c.l.b16 %v483
    %v855 = vunpack.c.h.b16 %v483
    %v856 = vunpack.c.l.b16 %v484
    %v857 = vunpack.c.h.b16 %v484
    %v858 = vunpack.c.l.b16 %v485
    %v859 = vunpack.c.h.b16 %v485
    %v860 = vunpack.c.l.b16 %v486
    %v861 = vunpack.c.h.b16 %v486
    %v862 = vunpack.c.l.b16 %v487
    %v863 = vunpack.c.h.b16 %v487
    %v864 = vunpack.c.l.b16 %v488
    %v865 = vunpack.c.h.b16 %v488
    %v866 = vunpack.c.l.b16 %v489
    %v867 = vunpack.c.h.b16 %v489
    %v868 = vunpack.c.l.b16 %v490
    %v869 = vunpack.c.h.b16 %v490
    %v870 = vunpack.c.l.b16 %v491
    %v871 = vunpack.c.h.b16 %v491
    %v872 = vunpack.c.l.b16 %v492
    %v873 = vunpack.c.h.b16 %v492
    %v874 = vunpack.c.l.b16 %v493
    %v875 = vunpack.c.h.b16 %v493
    %v876 = vunpack.c.l.b16 %v494
    %v877 = vunpack.c.h.b16 %v494
    %v878 = vunpack.c.l.b16 %v495
    %v879 = vunpack.c.h.b16 %v495
    %v880 = vunpack.c.l.b16 %v496
    %v881 = vunpack.c.h.b16 %v496
    %v882 = vunpack.c.l.b16 %v497
    %v883 = vunpack.c.h.b16 %v497
    %v884 = vunpack.c.l.b16 %v498
    %v885 = vunpack.c.h.b16 %v498
    %v886 = vunpack.c.l.b16 %v499
    %v887 = vunpack.c.h.b16 %v499
    %v888 = vunpack.c.l.b16 %v500
    %v889 = vunpack.c.h.b16 %v500
    %v890 = vunpack.c.l.b16 %v501
    %v891 = vunpack.c.h.b16 %v501
    %v892 = vunpack.c.l.b16 %v502
    %v893 = vunpack.c.h.b16 %v502
    %v894 = vunpack.c.l.b16 %v503
    %v895 = vunpack.c.h.b16 %v503
    %v896 = vunpack.c.l.b16 %v504
    %v897 = vunpack.c.h.b16 %v504
    %v898 = vunpack.c.l.b16 %v505
    %v899 = vunpack.c.h.b16 %v505
    %v900 = vpack.c.b16 %v648, %v644
    %v901 = vpack.c.b16 %v649, %v645
    %v902 = vpack.c.b16 %v650, %v646
    %v903 = vpack.c.b16 %v651, %v647
    %v904 = vpack.c.b16 %v656, %v652
    %v905 = vpack.c.b16 %v657, %v653
    %v906 = vpack.c.b16 %v658, %v654
    %v907 = vpack.c.b16 %v659, %v655
    %v908 = vpack.c.b16 %v664, %v660
    %v909 = vpack.c.b16 %v665, %v661
    %v910 = vpack.c.b16 %v666, %v662
    %v911 = vpack.c.b16 %v667, %v663
    %v912 = vpack.c.b16 %v672, %v668
    %v913 = vpack.c.b16 %v673, %v669
    %v914 = vpack.c.b16 %v674, %v670
    %v915 = vpack.c.b16 %v675, %v671
    %v916 = vpack.c.b16 %v680, %v676
    %v917 = vpack.c.b16 %v681, %v677
    %v918 = vpack.c.b16 %v682, %v678
    %v919 = vpack.c.b16 %v683, %v679
    %v920 = vpack.c.b16 %v688, %v684
    %v921 = vpack.c.b16 %v689, %v685
    %v922 = vpack.c.b16 %v690, %v686
    %v923 = vpack.c.b16 %v691, %v687
    %v924 = vpack.c.b16 %v696, %v692
    %v925 = vpack.c.b16 %v697, %v693
    %v926 = vpack.c.b16 %v698, %v694
    %v927 = vpack.c.b16 %v699, %v695
    %v928 = vpack.c.b16 %v704, %v700
    %v929 = vpack.c.b16 %v705, %v701
    %v930 = vpack.c.b16 %v706, %v702
    %v931 = vpack.c.b16 %v707, %v703
    %v932 = vpack.c.b16 %v712, %v708
    %v933 = vpack.c.b16 %v713, %v709
    %v934 = vpack.c.b16 %v714, %v710
    %v935 = vpack.c.b16 %v715, %v711
    %v936 = vpack.c.b16 %v720, %v716
    %v937 = vpack.c.b16 %v721, %v717
    %v938 = vpack.c.b16 %v722, %v718
    %v939 = vpack.c.b16 %v723, %v719
    %v940 = vpack.c.b16 %v728, %v724
    %v941 = vpack.c.b16 %v729, %v725
    %v942 = vpack.c.b16 %v730, %v726
    %v943 = vpack.c.b16 %v731, %v727
    %v944 = vpack.c.b16 %v736, %v732
    %v945 = vpack.c.b16 %v737, %v733
    %v946 = vpack.c.b16 %v738, %v734
    %v947 = vpack.c.b16 %v739, %v735
    %v948 = vpack.c.b16 %v744, %v740
    %v949 = vpack.c.b16 %v745, %v741
    %v950 = vpack.c.b16 %v746, %v742
    %v951 = vpack.c.b16 %v747, %v743
    %v952 = vpack.c.b16 %v752, %v748
    %v953 = vpack.c.b16 %v753, %v749
    %v954 = vpack.c.b16 %v754, %v750
    %v955 = vpack.c.b16 %v755, %v751
    %v956 = vpack.c.b16 %v760, %v756
    %v957 = vpack.c.b16 %v761, %v757
    %v958 = vpack.c.b16 %v762, %v758
    %v959 = vpack.c.b16 %v763, %v759
    %v960 = vpack.c.b16 %v768, %v764
    %v961 = vpack.c.b16 %v769, %v765
    %v962 = vpack.c.b16 %v770, %v766
    %v963 = vpack.c.b16 %v771, %v767
    %v964 = vpack.c.b16 %v776, %v772
    %v965 = vpack.c.b16 %v777, %v773
    %v966 = vpack.c.b16 %v778, %v774
    %v967 = vpack.c.b16 %v779, %v775
    %v968 = vpack.c.b16 %v784, %v780
    %v969 = vpack.c.b16 %v785, %v781
    %v970 = vpack.c.b16 %v786, %v782
    %v971 = vpack.c.b16 %v787, %v783
    %v972 = vpack.c.b16 %v792, %v788
    %v973 = vpack.c.b16 %v793, %v789
    %v974 = vpack.c.b16 %v794, %v790
    %v975 = vpack.c.b16 %v795, %v791
    %v976 = vpack.c.b16 %v800, %v796
    %v977 = vpack.c.b16 %v801, %v797
    %v978 = vpack.c.b16 %v802, %v798
    %v979 = vpack.c.b16 %v803, %v799
    %v980 = vpack.c.b16 %v808, %v804
    %v981 = vpack.c.b16 %v809, %v805
    %v982 = vpack.c.b16 %v810, %v806
    %v983 = vpack.c.b16 %v811, %v807
    %v984 = vpack.c.b16 %v816, %v812
    %v985 = vpack.c.b16 %v817, %v813
    %v986 = vpack.c.b16 %v818, %v814
    %v987 = vpack.c.b16 %v819, %v815
    %v988 = vpack.c.b16 %v824, %v820
    %v989 = vpack.c.b16 %v825, %v821
    %v990 = vpack.c.b16 %v826, %v822
    %v991 = vpack.c.b16 %v827, %v823
    %v992 = vpack.c.b16 %v832, %v828
    %v993 = vpack.c.b16 %v833, %v829
    %v994 = vpack.c.b16 %v834, %v830
    %v995 = vpack.c.b16 %v835, %v831
    %v996 = vpack.c.b16 %v840, %v836
    %v997 = vpack.c.b16 %v841, %v837
    %v998 = vpack.c.b16 %v842, %v838
    %v999 = vpack.c.b16 %v843, %v839
    %v1000 = vpack.c.b16 %v848, %v844
    %v1001 = vpack.c.b16 %v849, %v845
    %v1002 = vpack.c.b16 %v850, %v846
    %v1003 = vpack.c.b16 %v851, %v847
    %v1004 = vpack.c.b16 %v856, %v852
    %v1005 = vpack.c.b16 %v857, %v853
    %v1006 = vpack.c.b16 %v858, %v854
    %v1007 = vpack.c.b16 %v859, %v855
    %v1008 = vpack.c.b16 %v864, %v860
    %v1009 = vpack.c.b16 %v865, %v861
    %v1010 = vpack.c.b16 %v866, %v862
    %v1011 = vpack.c.b16 %v867, %v863
    %v1012 = vpack.c.b16 %v872, %v868
    %v1013 = vpack.c.b16 %v873, %v869
    %v1014 = vpack.c.b16 %v874, %v870
    %v1015 = vpack.c.b16 %v875, %v871
    %v1016 = vpack.c.b16 %v880, %v876
    %v1017 = vpack.c.b16 %v881, %v877
    %v1018 = vpack.c.b16 %v882, %v878
    %v1019 = vpack.c.b16 %v883, %v879
    %v1020 = vpack.c.b16 %v888, %v884
    %v1021 = vpack.c.b16 %v889, %v885
    %v1022 = vpack.c.b16 %v890, %v886
    %v1023 = vpack.c.b16 %v891, %v887
    %v1024 = vpack.c.b16 %v896, %v892
    %v1025 = vpack.c.b16 %v897, %v893
    %v1026 = vpack.c.b16 %v898, %v894
    %v1027 = vpack.c.b16 %v899, %v895
    %1156 = vmatpush.bf16.msra.mxu0 %v928
    %1157 = vmatpush.bf16.msra.mxu0 %v924
    %1158 = vmatpush.bf16.msra.mxu0 %v920
    %1159 = vmatpush.bf16.msra.mxu0 %v916
    %1160 = vmatpush.bf16.msra.mxu0 %v912
    %1161 = vmatpush.bf16.msra.mxu0 %v908
    %1162 = vmatpush.bf16.msra.mxu0 %v904
    %1163 = vmatpush.bf16.msra.mxu0 %v900
    %1164 = vmatmul.bf16.gmra.mxu0 %v374
    %v1165 = vpop.f32.mrf.mxu0
    %v1166 = vadd.f32 %v508, %v1165
    %v1167 = vpop.f32.mrf.mxu0
    %1168 = vdwg.mxu0
    %1169 = vmatpush.bf16.msra.mxu0 %v960
    %1170 = vmatpush.bf16.msra.mxu0 %v956
    %1171 = vmatpush.bf16.msra.mxu0 %v952
    %1172 = vmatpush.bf16.msra.mxu0 %v948
    %1173 = vmatpush.bf16.msra.mxu0 %v944
    %1174 = vmatpush.bf16.msra.mxu0 %v940
    %1175 = vmatpush.bf16.msra.mxu0 %v936
    %1176 = vmatpush.bf16.msra.mxu0 %v932
    %1177 = vmatmul.bf16.gmra.mxu0 %v375
    %v1178 = vpop.f32.mrf.mxu0
    %v1179 = vadd.f32 %v1166, %v1178
    %v1180 = vpop.f32.mrf.mxu0
    %1181 = vdwg.mxu0
    %1182 = vmatpush.bf16.msra.mxu0 %v992
    %1183 = vmatpush.bf16.msra.mxu0 %v988
    %1184 = vmatpush.bf16.msra.mxu0 %v984
    %1185 = vmatpush.bf16.msra.mxu0 %v980
    %1186 = vmatpush.bf16.msra.mxu0 %v976
    %1187 = vmatpush.bf16.msra.mxu0 %v972
    %1188 = vmatpush.bf16.msra.mxu0 %v968
    %1189 = vmatpush.bf16.msra.mxu0 %v964
    %1190 = vmatmul.bf16.gmra.mxu0 %v376
    %v1191 = vpop.f32.mrf.mxu0
    %v1192 = vadd.f32 %v1179, %v1191
    %v1193 = vpop.f32.mrf.mxu0
    %1194 = vdwg.mxu0
    %1195 = vmatpush.bf16.msra.mxu0 %v1024
    %1196 = vmatpush.bf16.msra.mxu0 %v1020
    %1197 = vmatpush.bf16.msra.mxu0 %v1016
    %1198 = vmatpush.bf16.msra.mxu0 %v1012
    %1199 = vmatpush.bf16.msra.mxu0 %v1008
    %1200 = vmatpush.bf16.msra.mxu0 %v1004
    %1201 = vmatpush.bf16.msra.mxu0 %v1000
    %1202 = vmatpush.bf16.msra.mxu0 %v996
    %1203 = vmatmul.bf16.gmra.mxu0 %v377
    %v1204 = vpop.f32.mrf.mxu0
    %v1205 = vadd.f32 %v1192, %v1204
    %v1206 = vpop.f32.mrf.mxu0
    %1207 = vdwg.mxu0
    %1208 = vmatpush.bf16.msra.mxu0 %v929
    %1209 = vmatpush.bf16.msra.mxu0 %v925
    %1210 = vmatpush.bf16.msra.mxu0 %v921
    %1211 = vmatpush.bf16.msra.mxu0 %v917
    %1212 = vmatpush.bf16.msra.mxu0 %v913
    %1213 = vmatpush.bf16.msra.mxu0 %v909
    %1214 = vmatpush.bf16.msra.mxu0 %v905
    %1215 = vmatpush.bf16.msra.mxu0 %v901
    %1216 = vmatmul.bf16.gmra.mxu0 %v374
    %v1217 = vpop.f32.mrf.mxu0
    %v1218 = vadd.f32 %v509, %v1217
    %v1219 = vpop.f32.mrf.mxu0
    %1220 = vdwg.mxu0
    %1221 = vmatpush.bf16.msra.mxu0 %v961
    %1222 = vmatpush.bf16.msra.mxu0 %v957
    %1223 = vmatpush.bf16.msra.mxu0 %v953
    %1224 = vmatpush.bf16.msra.mxu0 %v949
    %1225 = vmatpush.bf16.msra.mxu0 %v945
    %1226 = vmatpush.bf16.msra.mxu0 %v941
    %1227 = vmatpush.bf16.msra.mxu0 %v937
    %1228 = vmatpush.bf16.msra.mxu0 %v933
    %1229 = vmatmul.bf16.gmra.mxu0 %v375
    %v1230 = vpop.f32.mrf.mxu0
    %v1231 = vadd.f32 %v1218, %v1230
    %v1232 = vpop.f32.mrf.mxu0
    %1233 = vdwg.mxu0
    %1234 = vmatpush.bf16.msra.mxu0 %v993
    %1235 = vmatpush.bf16.msra.mxu0 %v989
    %1236 = vmatpush.bf16.msra.mxu0 %v985
    %1237 = vmatpush.bf16.msra.mxu0 %v981
    %1238 = vmatpush.bf16.msra.mxu0 %v977
    %1239 = vmatpush.bf16.msra.mxu0 %v973
    %1240 = vmatpush.bf16.msra.mxu0 %v969
    %1241 = vmatpush.bf16.msra.mxu0 %v965
    %1242 = vmatmul.bf16.gmra.mxu0 %v376
    %v1243 = vpop.f32.mrf.mxu0
    %v1244 = vadd.f32 %v1231, %v1243
    %v1245 = vpop.f32.mrf.mxu0
    %1246 = vdwg.mxu0
    %1247 = vmatpush.bf16.msra.mxu0 %v1025
    %1248 = vmatpush.bf16.msra.mxu0 %v1021
    %1249 = vmatpush.bf16.msra.mxu0 %v1017
    %1250 = vmatpush.bf16.msra.mxu0 %v1013
    %1251 = vmatpush.bf16.msra.mxu0 %v1009
    %1252 = vmatpush.bf16.msra.mxu0 %v1005
    %1253 = vmatpush.bf16.msra.mxu0 %v1001
    %1254 = vmatpush.bf16.msra.mxu0 %v997
    %1255 = vmatmul.bf16.gmra.mxu0 %v377
    %v1256 = vpop.f32.mrf.mxu0
    %v1257 = vadd.f32 %v1244, %v1256
    %v1258 = vpop.f32.mrf.mxu0
    %1259 = vdwg.mxu0
    %1260 = vmatpush.bf16.msra.mxu0 %v930
    %1261 = vmatpush.bf16.msra.mxu0 %v926
    %1262 = vmatpush.bf16.msra.mxu0 %v922
    %1263 = vmatpush.bf16.msra.mxu0 %v918
    %1264 = vmatpush.bf16.msra.mxu0 %v914
    %1265 = vmatpush.bf16.msra.mxu0 %v910
    %1266 = vmatpush.bf16.msra.mxu0 %v906
    %1267 = vmatpush.bf16.msra.mxu0 %v902
    %1268 = vmatmul.bf16.gmra.mxu0 %v374
    %v1269 = vpop.f32.mrf.mxu0
    %v1270 = vadd.f32 %v510, %v1269
    %v1271 = vpop.f32.mrf.mxu0
    %1272 = vdwg.mxu0
    %1273 = vmatpush.bf16.msra.mxu0 %v962
    %1274 = vmatpush.bf16.msra.mxu0 %v958
    %1275 = vmatpush.bf16.msra.mxu0 %v954
    %1276 = vmatpush.bf16.msra.mxu0 %v950
    %1277 = vmatpush.bf16.msra.mxu0 %v946
    %1278 = vmatpush.bf16.msra.mxu0 %v942
    %1279 = vmatpush.bf16.msra.mxu0 %v938
    %1280 = vmatpush.bf16.msra.mxu0 %v934
    %1281 = vmatmul.bf16.gmra.mxu0 %v375
    %v1282 = vpop.f32.mrf.mxu0
    %v1283 = vadd.f32 %v1270, %v1282
    %v1284 = vpop.f32.mrf.mxu0
    %1285 = vdwg.mxu0
    %1286 = vmatpush.bf16.msra.mxu0 %v994
    %1287 = vmatpush.bf16.msra.mxu0 %v990
    %1288 = vmatpush.bf16.msra.mxu0 %v986
    %1289 = vmatpush.bf16.msra.mxu0 %v982
    %1290 = vmatpush.bf16.msra.mxu0 %v978
    %1291 = vmatpush.bf16.msra.mxu0 %v974
    %1292 = vmatpush.bf16.msra.mxu0 %v970
    %1293 = vmatpush.bf16.msra.mxu0 %v966
    %1294 = vmatmul.bf16.gmra.mxu0 %v376
    %v1295 = vpop.f32.mrf.mxu0
    %v1296 = vadd.f32 %v1283, %v1295
    %v1297 = vpop.f32.mrf.mxu0
    %1298 = vdwg.mxu0
    %1299 = vmatpush.bf16.msra.mxu0 %v1026
    %1300 = vmatpush.bf16.msra.mxu0 %v1022
    %1301 = vmatpush.bf16.msra.mxu0 %v1018
    %1302 = vmatpush.bf16.msra.mxu0 %v1014
    %1303 = vmatpush.bf16.msra.mxu0 %v1010
    %1304 = vmatpush.bf16.msra.mxu0 %v1006
    %1305 = vmatpush.bf16.msra.mxu0 %v1002
    %1306 = vmatpush.bf16.msra.mxu0 %v998
    %1307 = vmatmul.bf16.gmra.mxu0 %v377
    %v1308 = vpop.f32.mrf.mxu0
    %v1309 = vadd.f32 %v1296, %v1308
    %v1310 = vpop.f32.mrf.mxu0
    %1311 = vdwg.mxu0
    %1312 = vmatpush.bf16.msra.mxu0 %v931
    %1313 = vmatpush.bf16.msra.mxu0 %v927
    %1314 = vmatpush.bf16.msra.mxu0 %v923
    %1315 = vmatpush.bf16.msra.mxu0 %v919
    %1316 = vmatpush.bf16.msra.mxu0 %v915
    %1317 = vmatpush.bf16.msra.mxu0 %v911
    %1318 = vmatpush.bf16.msra.mxu0 %v907
    %1319 = vmatpush.bf16.msra.mxu0 %v903
    %1320 = vmatmul.bf16.gmra.mxu0 %v374
    %v1321 = vpop.f32.mrf.mxu0
    %v1322 = vadd.f32 %v511, %v1321
    %v1323 = vpop.f32.mrf.mxu0
    %1324 = vdwg.mxu0
    %1325 = vmatpush.bf16.msra.mxu0 %v963
    %1326 = vmatpush.bf16.msra.mxu0 %v959
    %1327 = vmatpush.bf16.msra.mxu0 %v955
    %1328 = vmatpush.bf16.msra.mxu0 %v951
    %1329 = vmatpush.bf16.msra.mxu0 %v947
    %1330 = vmatpush.bf16.msra.mxu0 %v943
    %1331 = vmatpush.bf16.msra.mxu0 %v939
    %1332 = vmatpush.bf16.msra.mxu0 %v935
    %1333 = vmatmul.bf16.gmra.mxu0 %v375
    %v1334 = vpop.f32.mrf.mxu0
    %v1335 = vadd.f32 %v1322, %v1334
    %v1336 = vpop.f32.mrf.mxu0
    %1337 = vdwg.mxu0
    %1338 = vmatpush.bf16.msra.mxu0 %v995
    %1339 = vmatpush.bf16.msra.mxu0 %v991
    %1340 = vmatpush.bf16.msra.mxu0 %v987
    %1341 = vmatpush.bf16.msra.mxu0 %v983
    %1342 = vmatpush.bf16.msra.mxu0 %v979
    %1343 = vmatpush.bf16.msra.mxu0 %v975
    %1344 = vmatpush.bf16.msra.mxu0 %v971
    %1345 = vmatpush.bf16.msra.mxu0 %v967
    %1346 = vmatmul.bf16.gmra.mxu0 %v376
    %v1347 = vpop.f32.mrf.mxu0
    %v1348 = vadd.f32 %v1335, %v1347
    %v1349 = vpop.f32.mrf.mxu0
    %1350 = vdwg.mxu0
    %1351 = vmatpush.bf16.msra.mxu0 %v1027
    %1352 = vmatpush.bf16.msra.mxu0 %v1023
    %1353 = vmatpush.bf16.msra.mxu0 %v1019
    %1354 = vmatpush.bf16.msra.mxu0 %v1015
    %1355 = vmatpush.bf16.msra.mxu0 %v1011
    %1356 = vmatpush.bf16.msra.mxu0 %v1007
    %1357 = vmatpush.bf16.msra.mxu0 %v1003
    %1358 = vmatpush.bf16.msra.mxu0 %v999
    %1359 = vmatmul.bf16.gmra.mxu0 %v377
    %v1360 = vpop.f32.mrf.mxu0
    %v1361 = vadd.f32 %v1348, %v1360
    %v1362 = vpop.f32.mrf.mxu0
    %1363 = vdwg.mxu0
    %v1364 = vmax.f32 %v1205, 0.0
    %v1365 = vmax.f32 %v1257, 0.0
    %v1366 = vmax.f32 %v1309, 0.0
    %v1367 = vmax.f32 %v1361, 0.0
    %v1368 = vpack.c.bf16 %v1364, %v1364
    %v1369 = vpack.c.bf16 %v1365, %v1365
    %v1370 = vpack.c.bf16 %v1366, %v1366
    %v1371 = vpack.c.bf16 %v1367, %v1367
    %v1372 = vld [vmem:[#allocation11] sm:$0xf]
    %v1373 = vld [vmem:[#allocation11 + $0x4] sm:$0xf]
    %v1374 = vld [vmem:[#allocation11 + $0x8] sm:$0xf]
    %v1375 = vld [vmem:[#allocation11 + $0xc] sm:$0xf]
    %v1376 = vld [vmem:[#allocation11 + $0x10] sm:$0xf]
    %v1377 = vld [vmem:[#allocation11 + $0x14] sm:$0xf]
    %v1378 = vld [vmem:[#allocation11 + $0x18] sm:$0xf]
    %v1379 = vld [vmem:[#allocation11 + $0x1c] sm:$0xf]
    %v1380 = vld [vmem:[#allocation11 + $0x20] sm:$0xf]
    %v1381 = vld [vmem:[#allocation11 + $0x24] sm:$0xf]
    %v1382 = vld [vmem:[#allocation11 + $0x28] sm:$0xf]
    %v1383 = vld [vmem:[#allocation11 + $0x2c] sm:$0xf]
    %v1384 = vld [vmem:[#allocation11 + $0x30] sm:$0xf]
    %v1385 = vld [vmem:[#allocation11 + $0x34] sm:$0xf]
    %v1386 = vld [vmem:[#allocation11 + $0x38] sm:$0xf]
    %v1387 = vld [vmem:[#allocation11 + $0x3c] sm:$0xf]
    %v1388 = vld [vmem:[#allocation11 + $0x40] sm:$0xf]
    %v1389 = vld [vmem:[#allocation11 + $0x44] sm:$0xf]
    %v1390 = vld [vmem:[#allocation11 + $0x48] sm:$0xf]
    %v1391 = vld [vmem:[#allocation11 + $0x4c] sm:$0xf]
    %v1392 = vld [vmem:[#allocation11 + $0x50] sm:$0xf]
    %v1393 = vld [vmem:[#allocation11 + $0x54] sm:$0xf]
    %v1394 = vld [vmem:[#allocation11 + $0x58] sm:$0xf]
    %v1395 = vld [vmem:[#allocation11 + $0x5c] sm:$0xf]
    %v1396 = vld [vmem:[#allocation11 + $0x60] sm:$0xf]
    %v1397 = vld [vmem:[#allocation11 + $0x64] sm:$0xf]
    %v1398 = vld [vmem:[#allocation11 + $0x68] sm:$0xf]
    %v1399 = vld [vmem:[#allocation11 + $0x6c] sm:$0xf]
    %v1400 = vld [vmem:[#allocation11 + $0x70] sm:$0xf]
    %v1401 = vld [vmem:[#allocation11 + $0x74] sm:$0xf]
    %v1402 = vld [vmem:[#allocation11 + $0x78] sm:$0xf]
    %v1403 = vld [vmem:[#allocation11 + $0x7c] sm:$0xf]
    %v1404 = vld [vmem:[#allocation11 + $0x80] sm:$0xf]
    %v1405 = vld [vmem:[#allocation11 + $0x84] sm:$0xf]
    %v1406 = vld [vmem:[#allocation11 + $0x88] sm:$0xf]
    %v1407 = vld [vmem:[#allocation11 + $0x8c] sm:$0xf]
    %v1408 = vld [vmem:[#allocation11 + $0x90] sm:$0xf]
    %v1409 = vld [vmem:[#allocation11 + $0x94] sm:$0xf]
    %v1410 = vld [vmem:[#allocation11 + $0x98] sm:$0xf]
    %v1411 = vld [vmem:[#allocation11 + $0x9c] sm:$0xf]
    %v1412 = vld [vmem:[#allocation11 + $0xa0] sm:$0xf]
    %v1413 = vld [vmem:[#allocation11 + $0xa4] sm:$0xf]
    %v1414 = vld [vmem:[#allocation11 + $0xa8] sm:$0xf]
    %v1415 = vld [vmem:[#allocation11 + $0xac] sm:$0xf]
    %v1416 = vld [vmem:[#allocation11 + $0xb0] sm:$0xf]
    %v1417 = vld [vmem:[#allocation11 + $0xb4] sm:$0xf]
    %v1418 = vld [vmem:[#allocation11 + $0xb8] sm:$0xf]
    %v1419 = vld [vmem:[#allocation11 + $0xbc] sm:$0xf]
    %v1420 = vld [vmem:[#allocation11 + $0xc0] sm:$0xf]
    %v1421 = vld [vmem:[#allocation11 + $0xc4] sm:$0xf]
    %v1422 = vld [vmem:[#allocation11 + $0xc8] sm:$0xf]
    %v1423 = vld [vmem:[#allocation11 + $0xcc] sm:$0xf]
    %v1424 = vld [vmem:[#allocation11 + $0xd0] sm:$0xf]
    %v1425 = vld [vmem:[#allocation11 + $0xd4] sm:$0xf]
    %v1426 = vld [vmem:[#allocation11 + $0xd8] sm:$0xf]
    %v1427 = vld [vmem:[#allocation11 + $0xdc] sm:$0xf]
    %v1428 = vld [vmem:[#allocation11 + $0xe0] sm:$0xf]
    %v1429 = vld [vmem:[#allocation11 + $0xe4] sm:$0xf]
    %v1430 = vld [vmem:[#allocation11 + $0xe8] sm:$0xf]
    %v1431 = vld [vmem:[#allocation11 + $0xec] sm:$0xf]
    %v1432 = vld [vmem:[#allocation11 + $0xf0] sm:$0xf]
    %v1433 = vld [vmem:[#allocation11 + $0xf4] sm:$0xf]
    %v1434 = vld [vmem:[#allocation11 + $0xf8] sm:$0xf]
    %v1435 = vld [vmem:[#allocation11 + $0xfc] sm:$0xf]
    %v1436 = vld [vmem:[%s6] sm:$0x1]
    %v1438 = vperm.slane %v1436, 0
    %v1504 = vunpack.c.l.b16 %v1372
    %v1505 = vunpack.c.l.b16 %v1373
    %v1506 = vunpack.c.l.b16 %v1374
    %v1507 = vunpack.c.l.b16 %v1375
    %v1508 = vunpack.c.l.b16 %v1376
    %v1509 = vunpack.c.l.b16 %v1377
    %v1510 = vunpack.c.l.b16 %v1378
    %v1511 = vunpack.c.l.b16 %v1379
    %v1512 = vunpack.c.l.b16 %v1380
    %v1513 = vunpack.c.l.b16 %v1381
    %v1514 = vunpack.c.l.b16 %v1382
    %v1515 = vunpack.c.l.b16 %v1383
    %v1516 = vunpack.c.l.b16 %v1384
    %v1517 = vunpack.c.l.b16 %v1385
    %v1518 = vunpack.c.l.b16 %v1386
    %v1519 = vunpack.c.l.b16 %v1387
    %v1520 = vunpack.c.l.b16 %v1388
    %v1521 = vunpack.c.l.b16 %v1389
    %v1522 = vunpack.c.l.b16 %v1390
    %v1523 = vunpack.c.l.b16 %v1391
    %v1524 = vunpack.c.l.b16 %v1392
    %v1525 = vunpack.c.l.b16 %v1393
    %v1526 = vunpack.c.l.b16 %v1394
    %v1527 = vunpack.c.l.b16 %v1395
    %v1528 = vunpack.c.l.b16 %v1396
    %v1529 = vunpack.c.l.b16 %v1397
    %v1530 = vunpack.c.l.b16 %v1398
    %v1531 = vunpack.c.l.b16 %v1399
    %v1532 = vunpack.c.l.b16 %v1400
    %v1533 = vunpack.c.l.b16 %v1401
    %v1534 = vunpack.c.l.b16 %v1402
    %v1535 = vunpack.c.l.b16 %v1403
    %v1536 = vunpack.c.l.b16 %v1404
    %v1537 = vunpack.c.l.b16 %v1405
    %v1538 = vunpack.c.l.b16 %v1406
    %v1539 = vunpack.c.l.b16 %v1407
    %v1540 = vunpack.c.l.b16 %v1408
    %v1541 = vunpack.c.l.b16 %v1409
    %v1542 = vunpack.c.l.b16 %v1410
    %v1543 = vunpack.c.l.b16 %v1411
    %v1544 = vunpack.c.l.b16 %v1412
    %v1545 = vunpack.c.l.b16 %v1413
    %v1546 = vunpack.c.l.b16 %v1414
    %v1547 = vunpack.c.l.b16 %v1415
    %v1548 = vunpack.c.l.b16 %v1416
    %v1549 = vunpack.c.l.b16 %v1417
    %v1550 = vunpack.c.l.b16 %v1418
    %v1551 = vunpack.c.l.b16 %v1419
    %v1552 = vunpack.c.l.b16 %v1420
    %v1553 = vunpack.c.l.b16 %v1421
    %v1554 = vunpack.c.l.b16 %v1422
    %v1555 = vunpack.c.l.b16 %v1423
    %v1556 = vunpack.c.l.b16 %v1424
    %v1557 = vunpack.c.l.b16 %v1425
    %v1558 = vunpack.c.l.b16 %v1426
    %v1559 = vunpack.c.l.b16 %v1427
    %v1560 = vunpack.c.l.b16 %v1428
    %v1561 = vunpack.c.l.b16 %v1429
    %v1562 = vunpack.c.l.b16 %v1430
    %v1563 = vunpack.c.l.b16 %v1431
    %v1564 = vunpack.c.l.b16 %v1432
    %v1565 = vunpack.c.l.b16 %v1433
    %v1566 = vunpack.c.l.b16 %v1434
    %v1567 = vunpack.c.l.b16 %v1435
    %v1568 = vpack.c.b16 %v1505, %v1504
    %v1569 = vpack.c.b16 %v1507, %v1506
    %v1570 = vpack.c.b16 %v1509, %v1508
    %v1571 = vpack.c.b16 %v1511, %v1510
    %v1572 = vpack.c.b16 %v1513, %v1512
    %v1573 = vpack.c.b16 %v1515, %v1514
    %v1574 = vpack.c.b16 %v1517, %v1516
    %v1575 = vpack.c.b16 %v1519, %v1518
    %v1576 = vpack.c.b16 %v1521, %v1520
    %v1577 = vpack.c.b16 %v1523, %v1522
    %v1578 = vpack.c.b16 %v1525, %v1524
    %v1579 = vpack.c.b16 %v1527, %v1526
    %v1580 = vpack.c.b16 %v1529, %v1528
    %v1581 = vpack.c.b16 %v1531, %v1530
    %v1582 = vpack.c.b16 %v1533, %v1532
    %v1583 = vpack.c.b16 %v1535, %v1534
    %v1584 = vpack.c.b16 %v1537, %v1536
    %v1585 = vpack.c.b16 %v1539, %v1538
    %v1586 = vpack.c.b16 %v1541, %v1540
    %v1587 = vpack.c.b16 %v1543, %v1542
    %v1588 = vpack.c.b16 %v1545, %v1544
    %v1589 = vpack.c.b16 %v1547, %v1546
    %v1590 = vpack.c.b16 %v1549, %v1548
    %v1591 = vpack.c.b16 %v1551, %v1550
    %v1592 = vpack.c.b16 %v1553, %v1552
    %v1593 = vpack.c.b16 %v1555, %v1554
    %v1594 = vpack.c.b16 %v1557, %v1556
    %v1595 = vpack.c.b16 %v1559, %v1558
    %v1596 = vpack.c.b16 %v1561, %v1560
    %v1597 = vpack.c.b16 %v1563, %v1562
    %v1598 = vpack.c.b16 %v1565, %v1564
    %v1599 = vpack.c.b16 %v1567, %v1566
    %1632 = vmatpush.bf16.msra.mxu0 %v1575
    %1633 = vmatpush.bf16.msra.mxu0 %v1574
    %1634 = vmatpush.bf16.msra.mxu0 %v1573
    %1635 = vmatpush.bf16.msra.mxu0 %v1572
    %1636 = vmatpush.bf16.msra.mxu0 %v1571
    %1637 = vmatpush.bf16.msra.mxu0 %v1570
    %1638 = vmatpush.bf16.msra.mxu0 %v1569
    %1639 = vmatpush.bf16.msra.mxu0 %v1568
    %1640 = vmatmul.bf16.gmra.mxu0 %v1368
    %v1641 = vpop.f32.mrf.mxu0
    %v1642 = vadd.f32 %v1438, %v1641
    %v1643 = vpop.f32.mrf.mxu0
    %1644 = vdwg.mxu0
    %1645 = vmatpush.bf16.msra.mxu0 %v1583
    %1646 = vmatpush.bf16.msra.mxu0 %v1582
    %1647 = vmatpush.bf16.msra.mxu0 %v1581
    %1648 = vmatpush.bf16.msra.mxu0 %v1580
    %1649 = vmatpush.bf16.msra.mxu0 %v1579
    %1650 = vmatpush.bf16.msra.mxu0 %v1578
    %1651 = vmatpush.bf16.msra.mxu0 %v1577
    %1652 = vmatpush.bf16.msra.mxu0 %v1576
    %1653 = vmatmul.bf16.gmra.mxu0 %v1369
    %v1654 = vpop.f32.mrf.mxu0
    %v1655 = vadd.f32 %v1642, %v1654
    %v1656 = vpop.f32.mrf.mxu0
    %1657 = vdwg.mxu0
    %1658 = vmatpush.bf16.msra.mxu0 %v1591
    %1659 = vmatpush.bf16.msra.mxu0 %v1590
    %1660 = vmatpush.bf16.msra.mxu0 %v1589
    %1661 = vmatpush.bf16.msra.mxu0 %v1588
    %1662 = vmatpush.bf16.msra.mxu0 %v1587
    %1663 = vmatpush.bf16.msra.mxu0 %v1586
    %1664 = vmatpush.bf16.msra.mxu0 %v1585
    %1665 = vmatpush.bf16.msra.mxu0 %v1584
    %1666 = vmatmul.bf16.gmra.mxu0 %v1370
    %v1667 = vpop.f32.mrf.mxu0
    %v1668 = vadd.f32 %v1655, %v1667
    %v1669 = vpop.f32.mrf.mxu0
    %1670 = vdwg.mxu0
    %1671 = vmatpush.bf16.msra.mxu0 %v1599
    %1672 = vmatpush.bf16.msra.mxu0 %v1598
    %1673 = vmatpush.bf16.msra.mxu0 %v1597
    %1674 = vmatpush.bf16.msra.mxu0 %v1596
    %1675 = vmatpush.bf16.msra.mxu0 %v1595
    %1676 = vmatpush.bf16.msra.mxu0 %v1594
    %1677 = vmatpush.bf16.msra.mxu0 %v1593
    %1678 = vmatpush.bf16.msra.mxu0 %v1592
    %1679 = vmatmul.bf16.gmra.mxu0 %v1371
    %v1680 = vpop.f32.mrf.mxu0
    %v1681 = vadd.f32 %v1668, %v1680
    %v1682 = vpop.f32.mrf.mxu0
    %1683 = vdwg.mxu0
    %1684 = vst [vmem:[#allocation13] sm:$0xff] %v1681
    // Predicated region
    $region54: #{tpu_custom_call.1} parent=1 // pred_check
      _
    $region55: #{tpu_custom_call.1} parent=1 // pred_check_branch
      %1686 = sbr.rel (0) target = $region57
    $region56: #{tpu_custom_call.1} parent=1 // pred_region
      %1688 = vsyncadd [#allocation4], 0
      %s1690 = sshll.u32 [#allocation13], 4
      %s1691 = int_to_ptr.vmem [resolvable:$true] %s1690
      %s1692 = sshll.u32 %s7, 4
      %s1693 = int_to_ptr.hbm [resolvable:$true] %s1692
      %1695 = dma.vmem_to_hbm [thread:$0]  %s1691, 128, %s1693, [#allocation4]
    $region57: #{tpu_custom_call.1} parent=1 // pred_fallthru
      _
    // Predicated region
    $region58: #{tpu_custom_call.1} parent=1 // pred_check
      _
    $region59: #{tpu_custom_call.1} parent=1 // pred_check_branch
      %1697 = sbr.rel (0) target = $region61
    $region60: #{tpu_custom_call.1} parent=1 // pred_region
      %1699 = dma.done [#allocation4], 128
    $region61: #{tpu_custom_call.1} parent=1 // pred_fallthru
      _
    %1700 = vsyncpa [#allocation3], 1
    %1701 = vsyncpa [#allocation6], 1
    %1702 = vsyncpa [#allocation9], 1
    %1703 = vsyncpa [#allocation12], 1
    %1704 = vsyncpa [#allocation4], 1

</llo_original>
